<compile_context>
chip_gen: v6e
topology: v6e:2x2x1
jax: 0.10.0
libtpu: 0.0.40
codegen_flags: <defaults>
</compile_context>

<pallas_src>
import functools

import jax
import jax.numpy as jnp
import numpy as np
from jax.experimental import pallas as pl
from jax.experimental.pallas import tpu as pltpu


def _focal_loss_kernel(n_ref, xt_ref, alpha_ref, out_ref, *, gamma, num_classes, tb):
    i = pl.program_id(0)
    n_valid = n_ref[0]                               # SMEM scalar: true batch size

    blk = xt_ref[...]                                # (C+1, TB) f32; row C = targets bits
    x = blk[:num_classes, :]                         # (C, TB) logits, classes on sublanes
    t = pltpu.bitcast(blk[num_classes:, :], jnp.int32)  # (1, TB) int32 target ids
    alpha = alpha_ref[...].astype(jnp.float32)       # (C, 1) per-class weights

    # One-hot along the class (sublane) axis via iota compare.
    row = jax.lax.broadcasted_iota(jnp.int32, x.shape, 0)     # (C, TB)
    mask = (row == t).astype(jnp.float32)                     # (C, TB)

    # Log-softmax over classes (axis 0); reuse the exps for the target prob.
    m = jnp.max(x, axis=0, keepdims=True)                     # (1, TB)
    e = jnp.exp(x - m)                                        # (C, TB), <= 1
    sumexp = jnp.sum(e, axis=0, keepdims=True)                # (1, TB)
    e_t = jnp.sum(e * mask, axis=0, keepdims=True)            # (1, TB) exp(x_t - m)
    x_t = jnp.sum(x * mask, axis=0, keepdims=True)            # (1, TB) target logit
    alpha_t = jnp.sum(alpha * mask, axis=0, keepdims=True)    # (1, TB) alpha[target]

    log_p = x_t - m - jnp.log(sumexp)                         # log softmax[target]
    p = e_t / sumexp                                          # softmax[target]
    q = jnp.maximum(1.0 - p, 0.0)                             # guard fp p > 1

    # (1 - p)^gamma without jnp.power (which lowers to exp(gamma*log(x))).
    if gamma == 0.0:
        focal = jnp.ones_like(q)
    elif gamma == 1.0:
        focal = q
    elif gamma == 1.5:
        focal = q * jnp.sqrt(q)
    elif gamma == 2.0:
        focal = q * q
    else:
        focal = jnp.exp(gamma * jnp.log1p(-jnp.minimum(p, 1.0)))

    loss = -alpha_t * focal * log_p                           # (1, TB)

    # Mask padded / OOB batch lanes (ragged last block reads garbage -> zeroed here).
    col = i * tb + jax.lax.broadcasted_iota(jnp.int32, loss.shape, 1)
    loss = jnp.where(col < n_valid, loss, 0.0)

    partial = jnp.sum(loss)                                   # scalar per block

    lane = jax.lax.broadcasted_iota(jnp.int32, out_ref.shape, 1)
    out_ref[...] = jnp.where(lane == 0, partial, 0.0)


def focal_loss(inputs, targets, alpha, *, gamma=1.5, size_average=True, block_b=None):
    """Pallas TPU implementation of FocalLoss.forward.

    inputs : (N, C) float logits
    targets: (N,)   int   class indices in [0, C)
    alpha  : (C, 1) float per-class weights (as in the module's __init__)
    """
    N, C = inputs.shape

    # --- Single prep pass: (C+1, N) f32; rows 0..C-1 = logits (lane-dense, classes
    # on sublanes), row C = int32 targets bitcast to f32 (rides the sublane padding).
    # TODO(synk): if upstream logits are bf16, keep them bf16 in a separate stream
    # (the bitcast-targets trick needs a 32-bit carrier) to cut HBM reads ~40%.
    x_f32 = inputs.astype(jnp.float32)
    t_bits = jax.lax.bitcast_convert_type(targets.astype(jnp.int32), jnp.float32)
    combined = jnp.concatenate([x_f32.T, t_bits[None, :]], axis=0)    # (C+1, N)
    alpha_col = jnp.asarray(alpha, jnp.float32).reshape(C, 1)

    # --- Generation-aware VMEM budget with padded-sublane + double-buffer accounting.
    try:
        vmem_cap = int(pltpu.get_tpu_info().vmem_capacity_bytes)
    except Exception:
        vmem_cap = 64 * 1024 * 1024                      # conservative (v7x per-TC)
    vmem_limit = min(vmem_cap // 2, 32 * 1024 * 1024)    # requested scoped limit
    sub = ((C + 1 + 7) // 8) * 8                         # sublane-padded tile rows
    input_budget = (vmem_limit * 3) // 4                 # headroom for out/alpha/scratch
    tb_vmem = max(128, (input_budget // (2 * sub * 4)) // 128 * 128)

    # Give the "parallel" grid axis >= min(4, ceil(N/128)) blocks so v7x's two
    # TensorCores (and the DMA pipeline) both get work for large N.
    n_lane_blocks = pl.cdiv(N, 128)
    min_blocks = min(4, n_lane_blocks)
    tb_split = pl.cdiv(n_lane_blocks, min_blocks) * 128

    if block_b is None:
        TB = max(128, min(tb_vmem, tb_split))
    else:
        TB = max(128, (int(block_b) // 128) * 128)
    G = pl.cdiv(N, TB)

    kernel = functools.partial(
        _focal_loss_kernel, gamma=float(gamma), num_classes=int(C), tb=int(TB)
    )

    partials = pl.pallas_call(
        kernel,
        out_shape=jax.ShapeDtypeStruct((1, G * 128), jnp.float32),
        grid_spec=pltpu.PrefetchScalarGridSpec(
            num_scalar_prefetch=1,                       # n_valid scalar in SMEM
            grid=(G,),
            in_specs=[
                pl.BlockSpec((C + 1, TB), lambda i, n: (0, i)),  # logits+targets tile
                pl.BlockSpec((C, 1), lambda i, n: (0, 0)),       # alpha (resident, tiny)
            ],
            out_specs=pl.BlockSpec((1, 128), lambda i, n: (0, i)),
        ),
        compiler_params=pltpu.CompilerParams(
            dimension_semantics=("parallel",),
            vmem_limit_bytes=int(vmem_limit),
        ),
    )(jnp.array([N], dtype=jnp.int32), combined, alpha_col)

    total = jnp.sum(partials)                            # tiny reduce in JAX
    if size_average:
        total = total / jnp.float32(N)
    return total


def _focal_loss_ref(inputs, targets, alpha, gamma=1.5, size_average=True):
    # Pure-JAX reference mirroring the PyTorch forward exactly.
    N, C = inputs.shape
    P = jax.nn.softmax(inputs.astype(jnp.float32), axis=1)
    class_mask = jax.nn.one_hot(targets, C, dtype=jnp.float32)
    probs = jnp.sum(P * class_mask, axis=1, keepdims=True)
    alpha_t = jnp.asarray(alpha, jnp.float32).reshape(-1)[targets].reshape(-1, 1)
    log_p = jnp.log(probs)
    batch_loss = -alpha_t * jnp.power(1.0 - probs, gamma) * log_p
    return jnp.mean(batch_loss) if size_average else jnp.sum(batch_loss)


if __name__ == "__main__":
    class_num = 4
    key = jax.random.PRNGKey(0)

    # Case 1: tiny batch (matches module usage), size_average=True, single grid block,
    # ragged block (N=8 < 128 lanes).
    N = 8
    k_x, k_t, key = jax.random.split(key, 3)
    inputs = jax.random.normal(k_x, (N, class_num), dtype=jnp.float32)
    targets = jax.random.randint(k_t, (N,), 0, class_num, dtype=jnp.int32)
    alpha = jnp.ones((class_num, 1), dtype=jnp.float32)

    loss = focal_loss(inputs, targets, alpha, gamma=1.5, size_average=True)
    loss = jax.block_until_ready(loss)
    ref = _focal_loss_ref(inputs, targets, alpha, gamma=1.5, size_average=True)
    np.testing.assert_allclose(np.asarray(loss), np.asarray(ref), rtol=1e-5, atol=1e-6)

    # Case 2: ragged batch, forced small tile (block_b=128 -> 3 blocks), per-class
    # alpha, sum reduction.
    N2 = 300
    k_x2, k_t2, key = jax.random.split(key, 3)
    inputs2 = jax.random.normal(k_x2, (N2, class_num), dtype=jnp.float32)
    targets2 = jax.random.randint(k_t2, (N2,), 0, class_num, dtype=jnp.int32)
    alpha2 = jnp.array([[0.25], [0.5], [0.75], [1.0]], dtype=jnp.float32)

    loss2 = focal_loss(inputs2, targets2, alpha2, gamma=1.5,
                       size_average=False, block_b=128)
    loss2 = jax.block_until_ready(loss2)
    ref2 = _focal_loss_ref(inputs2, targets2, alpha2, gamma=1.5, size_average=False)
    np.testing.assert_allclose(np.asarray(loss2), np.asarray(ref2), rtol=2e-5, atol=1e-4)

    # Case 3: auto tile-size path (multi-block, ragged last block), gamma=2.0, mean.
    N3 = 1000
    k_x3, k_t3, key = jax.random.split(key, 3)
    inputs3 = jax.random.normal(k_x3, (N3, class_num), dtype=jnp.float32)
    targets3 = jax.random.randint(k_t3, (N3,), 0, class_num, dtype=jnp.int32)
    alpha3 = jnp.ones((class_num, 1), dtype=jnp.float32) * 0.25

    loss3 = focal_loss(inputs3, targets3, alpha3, gamma=2.0, size_average=True)
    loss3 = jax.block_until_ready(loss3)
    ref3 = _focal_loss_ref(inputs3, targets3, alpha3, gamma=2.0, size_average=True)
    np.testing.assert_allclose(np.asarray(loss3), np.asarray(ref3), rtol=2e-5, atol=1e-6)

    print("KERNEL_OK")
</pallas_src>

<mosaic_0001>
module attributes {stable_mosaic.version = 11 : i64} {
  func.func @_focal_loss_kernel(%arg0: i32, %arg1: memref<1xi32, #tpu.memory_space<smem>>, %arg2: memref<5x128xf32, #tpu.memory_space<vmem>>, %arg3: memref<4x1xf32, #tpu.memory_space<vmem>>, %arg4: memref<1x128xf32, #tpu.memory_space<vmem>>) attributes {dimension_semantics = [#tpu.dimension_semantics<parallel>], iteration_bounds = array<i64: 1>, scalar_prefetch = 1 : i64, scratch_operands = 0 : i64, tpu.core_type = #tpu.core_type<tc>, window_params = [{transform_indices = @transform_0, window_bounds = array<i64: 5, 128>}, {pipeline_mode = #tpu.pipeline_mode<synchronous>, transform_indices = @transform_1, window_bounds = array<i64: 4, 1>}, {transform_indices = @transform_2, window_bounds = array<i64: 1, 128>}]} {
    %c0 = arith.constant 0 : index
    %0 = memref.load %arg1[%c0] : memref<1xi32, #tpu.memory_space<smem>>
    %c0_0 = arith.constant 0 : index
    %c0_1 = arith.constant 0 : index
    %1 = vector.load %arg2[%c0_0, %c0_1] : memref<5x128xf32, #tpu.memory_space<vmem>>, vector<5x128xf32>
    %2 = vector.extract_strided_slice %1 {offsets = [0, 0], sizes = [4, 128], strides = [1, 1]} : vector<5x128xf32> to vector<4x128xf32>
    %3 = vector.extract_strided_slice %1 {offsets = [4, 0], sizes = [1, 128], strides = [1, 1]} : vector<5x128xf32> to vector<1x128xf32>
    %4 = tpu.bitcast %3 : vector<1x128xf32> -> vector<1x128xi32>
    %c0_2 = arith.constant 0 : index
    %c0_3 = arith.constant 0 : index
    %5 = vector.load %arg3[%c0_2, %c0_3] : memref<4x1xf32, #tpu.memory_space<vmem>>, vector<4x1xf32>
    %6 = tpu.iota {dimensions = array<i32: 0>} : vector<4x128xi32>
    %7 = vector.broadcast %4 : vector<1x128xi32> to vector<4x128xi32>
    %8 = arith.cmpi eq, %6, %7 : vector<4x128xi32>
    %9 = arith.extui %8 : vector<4x128xi1> to vector<4x128xi32>
    %10 = arith.sitofp %9 : vector<4x128xi32> to vector<4x128xf32>
    %cst = arith.constant dense<0xFF800000> : vector<128xf32>
    %11 = vector.multi_reduction <maximumf>, %2, %cst [0] : vector<4x128xf32> to vector<128xf32>
    %12 = vector.shape_cast %11 : vector<128xf32> to vector<1x128xf32>
    %13 = vector.broadcast %12 : vector<1x128xf32> to vector<4x128xf32>
    %14 = arith.subf %2, %13 : vector<4x128xf32>
    %15 = math.exp %14 : vector<4x128xf32>
    %cst_4 = arith.constant dense<0.000000e+00> : vector<128xf32>
    %16 = vector.multi_reduction <add>, %15, %cst_4 [0] : vector<4x128xf32> to vector<128xf32>
    %17 = vector.shape_cast %16 : vector<128xf32> to vector<1x128xf32>
    %18 = arith.mulf %15, %10 : vector<4x128xf32>
    %cst_5 = arith.constant dense<0.000000e+00> : vector<128xf32>
    %19 = vector.multi_reduction <add>, %18, %cst_5 [0] : vector<4x128xf32> to vector<128xf32>
    %20 = vector.shape_cast %19 : vector<128xf32> to vector<1x128xf32>
    %21 = arith.mulf %2, %10 : vector<4x128xf32>
    %cst_6 = arith.constant dense<0.000000e+00> : vector<128xf32>
    %22 = vector.multi_reduction <add>, %21, %cst_6 [0] : vector<4x128xf32> to vector<128xf32>
    %23 = vector.shape_cast %22 : vector<128xf32> to vector<1x128xf32>
    %24 = vector.broadcast %5 : vector<4x1xf32> to vector<4x128xf32>
    %25 = arith.mulf %24, %10 : vector<4x128xf32>
    %cst_7 = arith.constant dense<0.000000e+00> : vector<128xf32>
    %26 = vector.multi_reduction <add>, %25, %cst_7 [0] : vector<4x128xf32> to vector<128xf32>
    %27 = vector.shape_cast %26 : vector<128xf32> to vector<1x128xf32>
    %28 = arith.subf %23, %12 : vector<1x128xf32>
    %29 = math.log %17 : vector<1x128xf32>
    %30 = arith.subf %28, %29 : vector<1x128xf32>
    %31 = arith.divf %20, %17 : vector<1x128xf32>
    %cst_8 = arith.constant 1.000000e+00 : f32
    %32 = vector.broadcast %cst_8 : f32 to vector<1x128xf32>
    %33 = arith.subf %32, %31 : vector<1x128xf32>
    %cst_9 = arith.constant 0.000000e+00 : f32
    %34 = vector.broadcast %cst_9 : f32 to vector<1x128xf32>
    %35 = arith.maximumf %33, %34 : vector<1x128xf32>
    %36 = math.sqrt %35 : vector<1x128xf32>
    %37 = arith.mulf %35, %36 : vector<1x128xf32>
    %cst_10 = arith.constant 0.000000e+00 : f32
    %38 = vector.broadcast %cst_10 : f32 to vector<1x128xf32>
    %39 = arith.subf %38, %27 : vector<1x128xf32>
    %40 = arith.mulf %39, %37 : vector<1x128xf32>
    %41 = arith.mulf %40, %30 : vector<1x128xf32>
    %c128_i32 = arith.constant 128 : i32
    %42 = arith.muli %arg0, %c128_i32 : i32
    %43 = tpu.iota {dimensions = array<i32: 1>} : vector<1x128xi32>
    %44 = vector.broadcast %42 : i32 to vector<1x128xi32>
    %45 = arith.addi %44, %43 : vector<1x128xi32>
    %46 = vector.broadcast %0 : i32 to vector<1x128xi32>
    %47 = arith.cmpi slt, %45, %46 : vector<1x128xi32>
    %cst_11 = arith.constant 0.000000e+00 : f32
    %48 = vector.broadcast %cst_11 : f32 to vector<1x128xf32>
    %49 = arith.select %47, %41, %48 : vector<1x128xi1>, vector<1x128xf32>
    %50 = vector.shape_cast %49 : vector<1x128xf32> to vector<1x1x128xf32>
    %cst_12 = arith.constant dense<0.000000e+00> : vector<1xf32>
    %51 = vector.multi_reduction <add>, %50, %cst_12 [1, 2] : vector<1x1x128xf32> to vector<1xf32>
    %52 = vector.shape_cast %51 : vector<1xf32> to vector<1x1x1xf32>
    %53 = vector.extract %52[0, 0, 0] : f32 from vector<1x1x1xf32>
    %54 = tpu.iota {dimensions = array<i32: 1>} : vector<1x128xi32>
    %c0_i32 = arith.constant 0 : i32
    %55 = vector.broadcast %c0_i32 : i32 to vector<1x128xi32>
    %56 = arith.cmpi eq, %54, %55 : vector<1x128xi32>
    %cst_13 = arith.constant 0.000000e+00 : f32
    %57 = vector.broadcast %53 : f32 to vector<1x128xf32>
    %58 = vector.broadcast %cst_13 : f32 to vector<1x128xf32>
    %59 = arith.select %56, %57, %58 : vector<1x128xi1>, vector<1x128xf32>
    %c0_14 = arith.constant 0 : index
    %c0_15 = arith.constant 0 : index
    %60 = vector.load %arg4[%c0_14, %c0_15] : memref<1x128xf32, #tpu.memory_space<vmem>>, vector<1x128xf32>
    tpu.vector_store %arg4[%c0_14, %c0_15], %59 {strides = array<i32>} : memref<1x128xf32, #tpu.memory_space<vmem>>, vector<1x128xf32>,
    return
  }
  func.func @transform_0(%arg0: i32, %arg1: memref<1xi32, #tpu.memory_space<smem>>) -> (i32, i32) {
    %c0_i32 = arith.constant 0 : i32
    %c0_i32_0 = arith.constant 0 : i32
    return %c0_i32, %arg0 : i32, i32
  }
  func.func @transform_1(%arg0: i32, %arg1: memref<1xi32, #tpu.memory_space<smem>>) -> (i32, i32) {
    %c0_i32 = arith.constant 0 : i32
    %c0_i32_0 = arith.constant 0 : i32
    %c0_i32_1 = arith.constant 0 : i32
    return %c0_i32, %c0_i32_0 : i32, i32
  }
  func.func @transform_2(%arg0: i32, %arg1: memref<1xi32, #tpu.memory_space<smem>>) -> (i32, i32) {
    %c0_i32 = arith.constant 0 : i32
    %c0_i32_0 = arith.constant 0 : i32
    return %c0_i32, %arg0 : i32, i32
  }
}

</mosaic_0001>

<llo_original>
// kernel: tpu_custom_call.1
$region0: #{tpu_custom_call.1}
  #allocation0 [shape = 'u32[]', space=smem, size = 0x4, offset = 0x4, fixed_abs, tag = 'smem constant byte address 0x4 - core index']
  #allocation1 [shape = 'u32[144,128]{1,0:T(1,128)}', space=vmem, size = 0x12000, scoped, tag = 'internal scratch']
  #allocation2 [shape = 's32[1]{0}', space=sflag, size = 0x4, scoped, tag = 'scoped memory for tpu_custom_call.1']
  #allocation3 [shape = 's32[1]{0:T(128)S(6)}', space=smem, size = 0x200, scoped, tag = 'prefetched SMEM operand 0']
  %s0 = inlined_call_operand.<no memory space> [shape: s32[1], index: 0, kind: input, shape index: {}]
  %s1 = inlined_call_operand.hbm [shape: f32[5,8], index: 1, kind: input, shape index: {}]
  %s2 = inlined_call_operand.vmem [shape: f32[4,1], index: 2, kind: input, shape index: {}]
  %s3 = inlined_call_operand.hbm [shape: f32[1,128], index: 3, kind: output, shape index: {}]
  %s4 = sld [smem:[#allocation0]]
  $region22: #{tpu_custom_call.1} parent=0
    _
  %s6 = ssub.s32 1, %s4
  %s7 = scalar_select 0, %s6, %s4
  %8 = sst [smem:[#allocation3]] %s0
  $region1: #{tpu_custom_call.1} parent=0
    #allocation4 [shape = 'u8[4096]{0}', space=vmem, size = 0x1000, scoped, tag = 'input window, operand 1, single buffered']
    #allocation5 [shape = 's32[1]{0}', space=sflag, size = 0x4, scoped, tag = 'scoped memory for tpu_custom_call.1']
    #allocation6 [shape = 's32[1]{0}', space=sflag, size = 0x4, scoped, tag = 'scoped memory for tpu_custom_call.1']
    #allocation7 [shape = 'u8[512]{0}', space=vmem, size = 0x400, scoped, tag = 'output window, operand 0, single buffered']
    %9 = vsyncpa [#allocation5], 0
    %10 = vsyncpa [#allocation6], 0
    // Predicated region
    $region2: #{tpu_custom_call.1} parent=1 // pred_check
      _
    $region3: #{tpu_custom_call.1} parent=1 // pred_check_branch
      %12 = sbr.rel (0) target = $region5
    $region4: #{tpu_custom_call.1} parent=1 // pred_region
      %s14 = ssub.s32 128, 128
      %15 = vsyncadd [#allocation5], %s14
      %s17 = sshll.u32 [#allocation4], 4
      %s18 = int_to_ptr.vmem [resolvable:$true] %s17
      %20 = dma.hbm_to_vmem [thread:$0]  %s1, 128, %s18, [#allocation5]
    $region5: #{tpu_custom_call.1} parent=1 // pred_fallthru
      _
    // Predicated region
    $region6: #{tpu_custom_call.1} parent=1 // pred_check
      _
    $region7: #{tpu_custom_call.1} parent=1 // pred_check_branch
      %22 = sbr.rel (0) target = $region9
    $region8: #{tpu_custom_call.1} parent=1 // pred_region
      _
    $region9: #{tpu_custom_call.1} parent=1 // pred_fallthru
      _
    // Predicated region
    $region10: #{tpu_custom_call.1} parent=1 // pred_check
      _
    $region11: #{tpu_custom_call.1} parent=1 // pred_check_branch
      %24 = sbr.rel (0) target = $region13
    $region12: #{tpu_custom_call.1} parent=1 // pred_region
      %25 = dma.done [#allocation5], 128
    $region13: #{tpu_custom_call.1} parent=1 // pred_fallthru
      _
    %s26 = sld [smem:[#allocation3]]
    %v27 = vld [vmem:[#allocation4] sm:$0x1f]
    %v29 = vld [vmem:[%s2] sm:$0xf]
    %v30 = vlaneseq
    %v31 = vshrl.u32 %v30, 7
    %v32 = vlaneseq
    %v33 = vshrl.u32 %v32, 7
    %v34 = vsub.s32 4, %v33
    %v35 = vrot.slane %v27, %v34
    %vm36 = vcmp.eq.s32.totalorder %v31, %v35
    %v37 = vsel %vm36, 1, 0
    %v38 = vcvt.s32.f32 %v37
    %vm39 = vcmask 1043456
    %v40 = vsel %vm39, %v27, -inf
    %v41 = vrot.slane %v40, 4
    %v42 = vmax.f32 %v40, %v41
    %v43 = vrot.slane %v42, 2
    %v44 = vmax.f32 %v42, %v43
    %v45 = vrot.slane %v44, 1
    %v46 = vmax.f32 %v44, %v45
    %v47 = vsub.f32 %v27, %v46
    %v48 = vmul.f32 %v47, 1.442695
    %v49 = vpow.pop %v48
    %v50 = vsel %vm39, %v49, 0.0
    %v51 = vrot.slane %v50, 4
    %v52 = vadd.f32 %v50, %v51
    %v53 = vrot.slane %v52, 2
    %v54 = vadd.f32 %v52, %v53
    %v55 = vrot.slane %v54, 1
    %v56 = vadd.f32 %v54, %v55
    %v57 = vmul.f32 %v49, %v38
    %v58 = vsel %vm39, %v57, 0.0
    %v59 = vrot.slane %v58, 4
    %v60 = vadd.f32 %v58, %v59
    %v61 = vrot.slane %v60, 2
    %v62 = vadd.f32 %v60, %v61
    %v63 = vrot.slane %v62, 1
    %v64 = vadd.f32 %v62, %v63
    %v65 = vmul.f32 %v27, %v38
    %v66 = vsel %vm39, %v65, 0.0
    %v67 = vrot.slane %v66, 4
    %v68 = vadd.f32 %v66, %v67
    %v69 = vrot.slane %v68, 2
    %v70 = vadd.f32 %v68, %v69
    %v71 = vrot.slane %v70, 1
    %v72 = vadd.f32 %v70, %v71
    %74 = vset.pattern.permute.xlu0 0
    %75 = vperm.xlu0 %74, %v29
    %v76 = vpop.permute.xlu0 %75
    %v78 = vmul.f32 %v76, %v38
    %v79 = vsel %vm39, %v78, 0.0
    %v80 = vrot.slane %v79, 4
    %v81 = vadd.f32 %v79, %v80
    %v82 = vrot.slane %v81, 2
    %v83 = vadd.f32 %v81, %v82
    %v84 = vrot.slane %v83, 1
    %v85 = vadd.f32 %v83, %v84
    %v86 = vsub.f32 %v72, %v46
    %v87 = vlog2.pop %v56
    %v88 = vmul.f32 %v87, 0.6931472
    %v89 = vsub.f32 %v86, %v88
    %v90 = vrcp.pop %v56
    %v91 = vmul.f32 %v64, %v90
    %v92 = vsub.f32 1.0, %v91
    %v93 = vmax.f32 %v92, 0.0
    %v94 = vrsqrt.pop %v93
    %v95 = vmul.f32 %v93, %v94
    %vm96 = vcmp.eq.f32.partialorder %v93, inf
    %v97 = vsel %vm96, %v93, %v95
    %vm98 = vcmp.eq.f32.partialorder %v93, 0.0
    %v99 = vand.u32 %v93, 2147483648
    %v100 = vsel %vm98, %v99, %v97
    %v101 = vmul.f32 %v93, %v100
    %v102 = vsub.f32 0.0, %v85
    %v103 = vmul.f32 %v102, %v101
    %v104 = vmul.f32 %v103, %v89
    %s105 = smul.u32 0, 128
    %v106 = vlaneseq
    %v107 = vand.u32 %v106, 127
    %v108 = vstv %s105
    %v109 = vadd.s32 %v108, %v107
    %v110 = vstv %s26
    %vm111 = vcmp.lt.s32.totalorder %v109, %v110
    %v112 = vsel %vm111, %v104, 0.0
    %vm113 = vcmask 1040384
    %v114 = vsel %vm113, %v112, 0.0
    %115 = vadd.xlane.f32.xlu0 %v114
    %v116 = vpop.xlane.xlu0 %115
    %v117 = vrot.slane %v116, 4
    %v118 = vadd.f32 %v116, %v117
    %v119 = vrot.slane %v118, 2
    %v120 = vadd.f32 %v118, %v119
    %v121 = vrot.slane %v120, 1
    %v122 = vadd.f32 %v120, %v121
    %s123 = vtos %v122
    %vm124 = vcmp.eq.s32.totalorder %v107, 0
    %v125 = vstv %s123
    %v126 = vsel %vm124, %v125, 0.0
    %127 = vst [vmem:[#allocation7] sm:$0x1] %v126
    // Predicated region
    $region14: #{tpu_custom_call.1} parent=1 // pred_check
      _
    $region15: #{tpu_custom_call.1} parent=1 // pred_check_branch
      %129 = sbr.rel (0) target = $region17
    $region16: #{tpu_custom_call.1} parent=1 // pred_region
      %s131 = ssub.s32 16, 16
      %132 = vsyncadd [#allocation6], %s131
      %s134 = sshll.u32 [#allocation7], 4
      %s135 = int_to_ptr.vmem [resolvable:$true] %s134
      %137 = dma.vmem_to_hbm [thread:$0]  %s135, 16, %s3, [#allocation6]
    $region17: #{tpu_custom_call.1} parent=1 // pred_fallthru
      _
    // Predicated region
    $region18: #{tpu_custom_call.1} parent=1 // pred_check
      _
    $region19: #{tpu_custom_call.1} parent=1 // pred_check_branch
      %139 = sbr.rel (0) target = $region21
    $region20: #{tpu_custom_call.1} parent=1 // pred_region
      %140 = dma.done [#allocation6], 16
    $region21: #{tpu_custom_call.1} parent=1 // pred_fallthru
      _
    %141 = vsyncpa [#allocation5], 1
    %142 = vsyncpa [#allocation6], 1

</llo_original>
